<compile_context>
chip_gen: v6e
topology: v6e:2x2x1
jax: 0.10.0
libtpu: 0.0.40
codegen_flags: <defaults>
</compile_context>

<pallas_src>
import numpy as np
import jax
import jax.numpy as jnp
from jax.experimental import pallas as pl
from jax.experimental.pallas import tpu as pltpu


def _haar_idwt_matrices(out_h, out_w):
    """Original-convention haar synthesis matrices (used for the reference)."""
    c = 1.0 / np.sqrt(2.0)
    h, w = out_h // 2, out_w // 2
    L0 = np.zeros((h, out_h), np.float32)
    H0 = np.zeros((h, out_h), np.float32)
    for i in range(h):
        L0[i, 2 * i] = c
        L0[i, 2 * i + 1] = c
        H0[i, 2 * i] = c
        H0[i, 2 * i + 1] = -c
    L1 = np.zeros((w, out_w), np.float32)
    H1 = np.zeros((w, out_w), np.float32)
    for j in range(w):
        L1[j, 2 * j] = c
        L1[j, 2 * j + 1] = c
        H1[j, 2 * j] = c
        H1[j, 2 * j + 1] = -c
    return jnp.asarray(L0.T), jnp.asarray(H0.T), jnp.asarray(L1), jnp.asarray(H1)


def _fused_haar_synthesis_matrices(w):
    """Per-subband (w, 2W) matrices with width+height interleave folded in.

    Output row-pair layout: columns [0:W] -> even output row (height 2i),
    columns [W:2W] -> odd output row (height 2i+1). All entries are +/-0.5.
    """
    W = 2 * w
    G = np.zeros((4, w, 2 * W), np.float32)
    for j in range(w):
        for k in (0, 1):          # output row parity
            for p in (0, 1):      # output col parity
                col = k * W + 2 * j + p
                G[0, j, col] = 0.5                       # LL
                G[1, j, col] = 0.5 * (-1.0) ** p         # LH
                G[2, j, col] = 0.5 * (-1.0) ** k         # HL
                G[3, j, col] = 0.5 * (-1.0) ** (k + p)   # HH
    return tuple(jnp.asarray(G[s]) for s in range(4))


def _pick_block_rows(total_rows, w, W, vmem_budget=12 << 20, max_rows=2048):
    """Rows per grid step: divisor of total_rows, multiple of 8, VMEM-bounded,
    preferring a grid length >= 2 (keeps both v7x TensorCores busy)."""
    fixed = 4 * w * (2 * W) * 4                    # resident fused matrices
    per_row = 2 * (4 * w + 2 * W) * 4              # double-buffered in+out blocks
    cap = max(8, (vmem_budget - fixed) // per_row)
    cap = min(cap, max_rows, total_rows)
    candidates = [r for r in range(8, cap + 1, 8) if total_rows % r == 0]
    for r in reversed(candidates):
        if total_rows // r >= 2:
            return r
    if candidates:
        return candidates[-1]
    return total_rows  # full-extent fallback (always legal)


def _idwt_rows_kernel(ll_ref, lh_ref, hl_ref, hh_ref,
                      gll_ref, glh_ref, ghl_ref, ghh_ref, o_ref):
    acc = jnp.dot(ll_ref[...], gll_ref[...], preferred_element_type=jnp.float32)
    acc = acc + jnp.dot(lh_ref[...], glh_ref[...], preferred_element_type=jnp.float32)
    acc = acc + jnp.dot(hl_ref[...], ghl_ref[...], preferred_element_type=jnp.float32)
    acc = acc + jnp.dot(hh_ref[...], ghh_ref[...], preferred_element_type=jnp.float32)
    o_ref[...] = acc.astype(o_ref.dtype)


def upsample_v1_idwt_haar(LL, LH, HL, HH):
    """Forward of Upsample_v1 (haar IDWT_2D) as a Pallas TPU kernel."""
    N, C, h, w = LL.shape
    H, W = 2 * h, 2 * w
    total_rows = N * C * h

    GLL, GLH, GHL, GHH = _fused_haar_synthesis_matrices(w)
    rows = _pick_block_rows(total_rows, w, W)
    grid = total_rows // rows  # exact by construction

    flat = lambda x: x.reshape(total_rows, w)          # pure reshape, no copy
    in_spec = pl.BlockSpec((rows, w), lambda i: (i, 0))
    mat_spec = pl.BlockSpec((w, 2 * W), lambda i: (0, 0))   # resident constants
    out_spec = pl.BlockSpec((rows, 2 * W), lambda i: (i, 0))  # lane-dense store

    out = pl.pallas_call(
        _idwt_rows_kernel,
        out_shape=jax.ShapeDtypeStruct((total_rows, 2 * W), LL.dtype),
        grid_spec=pltpu.PrefetchScalarGridSpec(
            num_scalar_prefetch=0,
            grid=(grid,),
            in_specs=[in_spec, in_spec, in_spec, in_spec,
                      mat_spec, mat_spec, mat_spec, mat_spec],
            out_specs=out_spec,
        ),
        compiler_params=pltpu.CompilerParams(
            dimension_semantics=("parallel",),
            vmem_limit_bytes=32 * 1024 * 1024,
        ),
    )(flat(LL), flat(LH), flat(HL), flat(HH), GLL, GLH, GHL, GHH)

    # (total_rows, 2W) -> (N, C, h, 2, W) -> (N, C, H, W): copy-free reshapes
    # (the even/odd output rows were stored side-by-side along the lane dim).
    return out.reshape(N, C, h, 2, W).reshape(N, C, H, W)


if __name__ == "__main__":
    key = jax.random.PRNGKey(0)
    k1, k2, k3, k4 = jax.random.split(key, 4)
    N, C, h, w = 2, 4, 8, 8  # subband spatial size -> output 16x16
    LL = jax.random.normal(k1, (N, C, h, w), jnp.float32)
    LH = jax.random.normal(k2, (N, C, h, w), jnp.float32)
    HL = jax.random.normal(k3, (N, C, h, w), jnp.float32)
    HH = jax.random.normal(k4, (N, C, h, w), jnp.float32)

    x = upsample_v1_idwt_haar(LL, LH, HL, HH)
    jax.block_until_ready(x)

    # Pure-JAX reference (same math as IDWTFunction_2D.forward), full f32.
    a_l, a_h, b_l, b_h = _haar_idwt_matrices(2 * h, 2 * w)
    hp = jax.lax.Precision.HIGHEST
    low = (jnp.einsum('nchw,wW->nchW', LL, b_l, precision=hp)
           + jnp.einsum('nchw,wW->nchW', LH, b_h, precision=hp))
    high = (jnp.einsum('nchw,wW->nchW', HL, b_l, precision=hp)
            + jnp.einsum('nchw,wW->nchW', HH, b_h, precision=hp))
    ref = (jnp.einsum('Hh,nchW->ncHW', a_l, low, precision=hp)
           + jnp.einsum('Hh,nchW->ncHW', a_h, high, precision=hp))

    assert x.shape == (N, C, 2 * h, 2 * w), x.shape
    assert jnp.allclose(x, ref, atol=1e-5, rtol=1e-5), float(jnp.max(jnp.abs(x - ref)))
    print("KERNEL_OK")
</pallas_src>

<mosaic_0001>
module attributes {stable_mosaic.version = 11 : i64} {
  func.func @_idwt_rows_kernel(%arg0: i32, %arg1: memref<32x8xf32, #tpu.memory_space<vmem>>, %arg2: memref<32x8xf32, #tpu.memory_space<vmem>>, %arg3: memref<32x8xf32, #tpu.memory_space<vmem>>, %arg4: memref<32x8xf32, #tpu.memory_space<vmem>>, %arg5: memref<8x32xf32, #tpu.memory_space<vmem>>, %arg6: memref<8x32xf32, #tpu.memory_space<vmem>>, %arg7: memref<8x32xf32, #tpu.memory_space<vmem>>, %arg8: memref<8x32xf32, #tpu.memory_space<vmem>>, %arg9: memref<32x32xf32, #tpu.memory_space<vmem>>) attributes {dimension_semantics = [#tpu.dimension_semantics<parallel>], iteration_bounds = array<i64: 2>, scalar_prefetch = 0 : i64, scratch_operands = 0 : i64, tpu.core_type = #tpu.core_type<tc>, window_params = [{transform_indices = @transform_0, window_bounds = array<i64: 32, 8>}, {transform_indices = @transform_1, window_bounds = array<i64: 32, 8>}, {transform_indices = @transform_2, window_bounds = array<i64: 32, 8>}, {transform_indices = @transform_3, window_bounds = array<i64: 32, 8>}, {pipeline_mode = #tpu.pipeline_mode<synchronous>, transform_indices = @transform_4, window_bounds = array<i64: 8, 32>}, {pipeline_mode = #tpu.pipeline_mode<synchronous>, transform_indices = @transform_5, window_bounds = array<i64: 8, 32>}, {pipeline_mode = #tpu.pipeline_mode<synchronous>, transform_indices = @transform_6, window_bounds = array<i64: 8, 32>}, {pipeline_mode = #tpu.pipeline_mode<synchronous>, transform_indices = @transform_7, window_bounds = array<i64: 8, 32>}, {transform_indices = @transform_8, window_bounds = array<i64: 32, 32>}]} {
    %c0 = arith.constant 0 : index
    %c0_0 = arith.constant 0 : index
    %0 = vector.load %arg1[%c0, %c0_0] : memref<32x8xf32, #tpu.memory_space<vmem>>, vector<32x8xf32>
    %c0_1 = arith.constant 0 : index
    %c0_2 = arith.constant 0 : index
    %1 = vector.load %arg5[%c0_1, %c0_2] : memref<8x32xf32, #tpu.memory_space<vmem>>, vector<8x32xf32>
    %cst = arith.constant dense<0.000000e+00> : vector<32x32xf32>
    %2 = tpu.matmul %0, %1, %cst {dimension_numbers = #tpu.dot_dimension_numbers<[1], [0], [0], [1], [0, 0, 1, 1], [], []>} : vector<32x8xf32>, vector<8x32xf32>, vector<32x32xf32> -> vector<32x32xf32>
    %c0_3 = arith.constant 0 : index
    %c0_4 = arith.constant 0 : index
    %3 = vector.load %arg2[%c0_3, %c0_4] : memref<32x8xf32, #tpu.memory_space<vmem>>, vector<32x8xf32>
    %c0_5 = arith.constant 0 : index
    %c0_6 = arith.constant 0 : index
    %4 = vector.load %arg6[%c0_5, %c0_6] : memref<8x32xf32, #tpu.memory_space<vmem>>, vector<8x32xf32>
    %cst_7 = arith.constant dense<0.000000e+00> : vector<32x32xf32>
    %5 = tpu.matmul %3, %4, %cst_7 {dimension_numbers = #tpu.dot_dimension_numbers<[1], [0], [0], [1], [0, 0, 1, 1], [], []>} : vector<32x8xf32>, vector<8x32xf32>, vector<32x32xf32> -> vector<32x32xf32>
    %6 = arith.addf %2, %5 : vector<32x32xf32>
    %c0_8 = arith.constant 0 : index
    %c0_9 = arith.constant 0 : index
    %7 = vector.load %arg3[%c0_8, %c0_9] : memref<32x8xf32, #tpu.memory_space<vmem>>, vector<32x8xf32>
    %c0_10 = arith.constant 0 : index
    %c0_11 = arith.constant 0 : index
    %8 = vector.load %arg7[%c0_10, %c0_11] : memref<8x32xf32, #tpu.memory_space<vmem>>, vector<8x32xf32>
    %cst_12 = arith.constant dense<0.000000e+00> : vector<32x32xf32>
    %9 = tpu.matmul %7, %8, %cst_12 {dimension_numbers = #tpu.dot_dimension_numbers<[1], [0], [0], [1], [0, 0, 1, 1], [], []>} : vector<32x8xf32>, vector<8x32xf32>, vector<32x32xf32> -> vector<32x32xf32>
    %10 = arith.addf %6, %9 : vector<32x32xf32>
    %c0_13 = arith.constant 0 : index
    %c0_14 = arith.constant 0 : index
    %11 = vector.load %arg4[%c0_13, %c0_14] : memref<32x8xf32, #tpu.memory_space<vmem>>, vector<32x8xf32>
    %c0_15 = arith.constant 0 : index
    %c0_16 = arith.constant 0 : index
    %12 = vector.load %arg8[%c0_15, %c0_16] : memref<8x32xf32, #tpu.memory_space<vmem>>, vector<8x32xf32>
    %cst_17 = arith.constant dense<0.000000e+00> : vector<32x32xf32>
    %13 = tpu.matmul %11, %12, %cst_17 {dimension_numbers = #tpu.dot_dimension_numbers<[1], [0], [0], [1], [0, 0, 1, 1], [], []>} : vector<32x8xf32>, vector<8x32xf32>, vector<32x32xf32> -> vector<32x32xf32>
    %14 = arith.addf %10, %13 : vector<32x32xf32>
    %c0_18 = arith.constant 0 : index
    %c0_19 = arith.constant 0 : index
    %15 = vector.load %arg9[%c0_18, %c0_19] : memref<32x32xf32, #tpu.memory_space<vmem>>, vector<32x32xf32>
    tpu.vector_store %arg9[%c0_18, %c0_19], %14 {strides = array<i32>} : memref<32x32xf32, #tpu.memory_space<vmem>>, vector<32x32xf32>,
    return
  }
  func.func @transform_0(%arg0: i32) -> (i32, i32) {
    %c0_i32 = arith.constant 0 : i32
    %c0_i32_0 = arith.constant 0 : i32
    return %arg0, %c0_i32 : i32, i32
  }
  func.func @transform_1(%arg0: i32) -> (i32, i32) {
    %c0_i32 = arith.constant 0 : i32
    %c0_i32_0 = arith.constant 0 : i32
    return %arg0, %c0_i32 : i32, i32
  }
  func.func @transform_2(%arg0: i32) -> (i32, i32) {
    %c0_i32 = arith.constant 0 : i32
    %c0_i32_0 = arith.constant 0 : i32
    return %arg0, %c0_i32 : i32, i32
  }
  func.func @transform_3(%arg0: i32) -> (i32, i32) {
    %c0_i32 = arith.constant 0 : i32
    %c0_i32_0 = arith.constant 0 : i32
    return %arg0, %c0_i32 : i32, i32
  }
  func.func @transform_4(%arg0: i32) -> (i32, i32) {
    %c0_i32 = arith.constant 0 : i32
    %c0_i32_0 = arith.constant 0 : i32
    %c0_i32_1 = arith.constant 0 : i32
    return %c0_i32, %c0_i32_0 : i32, i32
  }
  func.func @transform_5(%arg0: i32) -> (i32, i32) {
    %c0_i32 = arith.constant 0 : i32
    %c0_i32_0 = arith.constant 0 : i32
    %c0_i32_1 = arith.constant 0 : i32
    return %c0_i32, %c0_i32_0 : i32, i32
  }
  func.func @transform_6(%arg0: i32) -> (i32, i32) {
    %c0_i32 = arith.constant 0 : i32
    %c0_i32_0 = arith.constant 0 : i32
    %c0_i32_1 = arith.constant 0 : i32
    return %c0_i32, %c0_i32_0 : i32, i32
  }
  func.func @transform_7(%arg0: i32) -> (i32, i32) {
    %c0_i32 = arith.constant 0 : i32
    %c0_i32_0 = arith.constant 0 : i32
    %c0_i32_1 = arith.constant 0 : i32
    return %c0_i32, %c0_i32_0 : i32, i32
  }
  func.func @transform_8(%arg0: i32) -> (i32, i32) {
    %c0_i32 = arith.constant 0 : i32
    %c0_i32_0 = arith.constant 0 : i32
    return %arg0, %c0_i32 : i32, i32
  }
}

</mosaic_0001>

<llo_original>
// kernel: tpu_custom_call.1
$region0: #{tpu_custom_call.1}
  #allocation0 [shape = 'u32[]', space=smem, size = 0x4, offset = 0x4, fixed_abs, tag = 'smem constant byte address 0x4 - core index']
  #allocation1 [shape = 'u32[144,128]{1,0:T(1,128)}', space=vmem, size = 0x12000, scoped, tag = 'internal scratch']
  %s0 = inlined_call_operand.vmem [shape: f32[64,8], index: 0, kind: input, shape index: {}]
  %s1 = inlined_call_operand.vmem [shape: f32[64,8], index: 1, kind: input, shape index: {}]
  %s2 = inlined_call_operand.vmem [shape: f32[64,8], index: 2, kind: input, shape index: {}]
  %s3 = inlined_call_operand.vmem [shape: f32[64,8], index: 3, kind: input, shape index: {}]
  %s4 = inlined_call_operand.vmem [shape: f32[8,32], index: 4, kind: input, shape index: {}]
  %s5 = inlined_call_operand.vmem [shape: f32[8,32], index: 5, kind: input, shape index: {}]
  %s6 = inlined_call_operand.vmem [shape: f32[8,32], index: 6, kind: input, shape index: {}]
  %s7 = inlined_call_operand.vmem [shape: f32[8,32], index: 7, kind: input, shape index: {}]
  %s8 = inlined_call_operand.vmem [shape: f32[64,32], index: 8, kind: output, shape index: {}]
  %s9 = sld [smem:[#allocation0]]
  $region65: #{tpu_custom_call.1} parent=0
    _
  %s11 = ssub.s32 1, %s9
  %s12 = scalar_select 0, %s11, %s9
  loop: start=0, step=1, limit=4
  $region2: #{tpu_custom_call.1} parent=0 // loop_pre_header
    _
  $region3: #{tpu_custom_call.1} parent=0 // loop_header
    %s14 = sphi 0, %s18
    %p15 = scmp.ge.s32.totalorder %s14, 4
    %s24 = sphi 0, %s26
    %s27 = sphi 0, %s24
    %s28 = sphi 0, %s27
    %s44 = sphi 0, %s28
    %s50 = sphi 0, %s52
    %s53 = sphi 0, %s50
    %s54 = sphi 0, %s53
    %s70 = sphi 0, %s54
    %s76 = sphi 0, %s78
    %s79 = sphi 0, %s76
    %s80 = sphi 0, %s79
    %s96 = sphi 0, %s80
    %s102 = sphi 0, %s104
    %s105 = sphi 0, %s102
    %s106 = sphi 0, %s105
    %s122 = sphi 0, %s106
    %s126 = sphi 0, %s126
    %s128 = sphi 0, %s126
    %s129 = sphi 0, %s128
    %s143 = sphi 0, %s129
    %s147 = sphi 0, %s147
    %s149 = sphi 0, %s147
    %s150 = sphi 0, %s149
    %s164 = sphi 0, %s150
    %s168 = sphi 0, %s168
    %s170 = sphi 0, %s168
    %s171 = sphi 0, %s170
    %s185 = sphi 0, %s171
    %s189 = sphi 0, %s189
    %s191 = sphi 0, %s189
    %s192 = sphi 0, %s191
    %s206 = sphi 0, %s192
    %s212 = sphi 0, %s214
    %s215 = sphi 0, %s212
    %s216 = sphi 0, %s215
    %s232 = sphi 0, %s216
  $region4: #{tpu_custom_call.1} parent=0 // loop_header_branch
    %17 = sbr.rel (%p15) target = $region8
  $region5: #{tpu_custom_call.1} parent=0 // loop_body
    %s19 = ssub.s32 %s14, 1
    %s20 = ssub.s32 %s14, 2
    %s21 = sadd.s32 %s14, 1
    %s22 = ssub.s32 %s14, %s21
    %p23 = scmp.eq.s32.totalorder %s22, 0
    %s25 = sadd.s32 %s24, 1
    %s26 = scalar_select %p23, %s24, %s25
    %p29 = pneg %p23
    %p30 = scmp.eq.s32.totalorder %s14, 1
    %p31 = por %p29, %p30
    %p32 = scmp.ne.s32.totalorder %s24, %s27
    %p33 = scmp.eq.s32.totalorder %s14, 0
    %p34 = por %p32, %p33
    %p35 = scmp.ne.s32.totalorder %s24, %s27
    %p36 = scmp.eq.s32.totalorder %s19, 1
    %p37 = por %p35, %p36
    %p38 = scmp.ne.s32.totalorder %s27, %s28
    %p39 = scmp.eq.s32.totalorder %s19, 0
    %p40 = por %p38, %p39
    %p41 = scmp.ne.s32.totalorder %s27, %s28
    %p42 = scmp.eq.s32.totalorder %s20, 1
    %p43 = por %p41, %p42
    %p45 = scmp.ne.s32.totalorder %s28, %s44
    %p46 = scmp.eq.s32.totalorder %s20, 0
    %p47 = por %p45, %p46
    %s48 = ssub.s32 %s14, %s21
    %p49 = scmp.eq.s32.totalorder %s48, 0
    %s51 = sadd.s32 %s50, 1
    %s52 = scalar_select %p49, %s50, %s51
    %p55 = pneg %p49
    %p56 = scmp.eq.s32.totalorder %s14, 1
    %p57 = por %p55, %p56
    %p58 = scmp.ne.s32.totalorder %s50, %s53
    %p59 = scmp.eq.s32.totalorder %s14, 0
    %p60 = por %p58, %p59
    %p61 = scmp.ne.s32.totalorder %s50, %s53
    %p62 = scmp.eq.s32.totalorder %s19, 1
    %p63 = por %p61, %p62
    %p64 = scmp.ne.s32.totalorder %s53, %s54
    %p65 = scmp.eq.s32.totalorder %s19, 0
    %p66 = por %p64, %p65
    %p67 = scmp.ne.s32.totalorder %s53, %s54
    %p68 = scmp.eq.s32.totalorder %s20, 1
    %p69 = por %p67, %p68
    %p71 = scmp.ne.s32.totalorder %s54, %s70
    %p72 = scmp.eq.s32.totalorder %s20, 0
    %p73 = por %p71, %p72
    %s74 = ssub.s32 %s14, %s21
    %p75 = scmp.eq.s32.totalorder %s74, 0
    %s77 = sadd.s32 %s76, 1
    %s78 = scalar_select %p75, %s76, %s77
    %p81 = pneg %p75
    %p82 = scmp.eq.s32.totalorder %s14, 1
    %p83 = por %p81, %p82
    %p84 = scmp.ne.s32.totalorder %s76, %s79
    %p85 = scmp.eq.s32.totalorder %s14, 0
    %p86 = por %p84, %p85
    %p87 = scmp.ne.s32.totalorder %s76, %s79
    %p88 = scmp.eq.s32.totalorder %s19, 1
    %p89 = por %p87, %p88
    %p90 = scmp.ne.s32.totalorder %s79, %s80
    %p91 = scmp.eq.s32.totalorder %s19, 0
    %p92 = por %p90, %p91
    %p93 = scmp.ne.s32.totalorder %s79, %s80
    %p94 = scmp.eq.s32.totalorder %s20, 1
    %p95 = por %p93, %p94
    %p97 = scmp.ne.s32.totalorder %s80, %s96
    %p98 = scmp.eq.s32.totalorder %s20, 0
    %p99 = por %p97, %p98
    %s100 = ssub.s32 %s14, %s21
    %p101 = scmp.eq.s32.totalorder %s100, 0
    %s103 = sadd.s32 %s102, 1
    %s104 = scalar_select %p101, %s102, %s103
    %p107 = pneg %p101
    %p108 = scmp.eq.s32.totalorder %s14, 1
    %p109 = por %p107, %p108
    %p110 = scmp.ne.s32.totalorder %s102, %s105
    %p111 = scmp.eq.s32.totalorder %s14, 0
    %p112 = por %p110, %p111
    %p113 = scmp.ne.s32.totalorder %s102, %s105
    %p114 = scmp.eq.s32.totalorder %s19, 1
    %p115 = por %p113, %p114
    %p116 = scmp.ne.s32.totalorder %s105, %s106
    %p117 = scmp.eq.s32.totalorder %s19, 0
    %p118 = por %p116, %p117
    %p119 = scmp.ne.s32.totalorder %s105, %s106
    %p120 = scmp.eq.s32.totalorder %s20, 1
    %p121 = por %p119, %p120
    %p123 = scmp.ne.s32.totalorder %s106, %s122
    %p124 = scmp.eq.s32.totalorder %s20, 0
    %p125 = por %p123, %p124
    %s127 = sadd.s32 %s126, 1
    %p130 = scmp.eq.s32.totalorder %s14, 1
    %p131 = scmp.ne.s32.totalorder %s126, %s128
    %p132 = scmp.eq.s32.totalorder %s14, 0
    %p133 = por %p131, %p132
    %p134 = scmp.ne.s32.totalorder %s126, %s128
    %p135 = scmp.eq.s32.totalorder %s19, 1
    %p136 = por %p134, %p135
    %p137 = scmp.ne.s32.totalorder %s128, %s129
    %p138 = scmp.eq.s32.totalorder %s19, 0
    %p139 = por %p137, %p138
    %p140 = scmp.ne.s32.totalorder %s128, %s129
    %p141 = scmp.eq.s32.totalorder %s20, 1
    %p142 = por %p140, %p141
    %p144 = scmp.ne.s32.totalorder %s129, %s143
    %p145 = scmp.eq.s32.totalorder %s20, 0
    %p146 = por %p144, %p145
    %s148 = sadd.s32 %s147, 1
    %p151 = scmp.eq.s32.totalorder %s14, 1
    %p152 = scmp.ne.s32.totalorder %s147, %s149
    %p153 = scmp.eq.s32.totalorder %s14, 0
    %p154 = por %p152, %p153
    %p155 = scmp.ne.s32.totalorder %s147, %s149
    %p156 = scmp.eq.s32.totalorder %s19, 1
    %p157 = por %p155, %p156
    %p158 = scmp.ne.s32.totalorder %s149, %s150
    %p159 = scmp.eq.s32.totalorder %s19, 0
    %p160 = por %p158, %p159
    %p161 = scmp.ne.s32.totalorder %s149, %s150
    %p162 = scmp.eq.s32.totalorder %s20, 1
    %p163 = por %p161, %p162
    %p165 = scmp.ne.s32.totalorder %s150, %s164
    %p166 = scmp.eq.s32.totalorder %s20, 0
    %p167 = por %p165, %p166
    %s169 = sadd.s32 %s168, 1
    %p172 = scmp.eq.s32.totalorder %s14, 1
    %p173 = scmp.ne.s32.totalorder %s168, %s170
    %p174 = scmp.eq.s32.totalorder %s14, 0
    %p175 = por %p173, %p174
    %p176 = scmp.ne.s32.totalorder %s168, %s170
    %p177 = scmp.eq.s32.totalorder %s19, 1
    %p178 = por %p176, %p177
    %p179 = scmp.ne.s32.totalorder %s170, %s171
    %p180 = scmp.eq.s32.totalorder %s19, 0
    %p181 = por %p179, %p180
    %p182 = scmp.ne.s32.totalorder %s170, %s171
    %p183 = scmp.eq.s32.totalorder %s20, 1
    %p184 = por %p182, %p183
    %p186 = scmp.ne.s32.totalorder %s171, %s185
    %p187 = scmp.eq.s32.totalorder %s20, 0
    %p188 = por %p186, %p187
    %s190 = sadd.s32 %s189, 1
    %p193 = scmp.eq.s32.totalorder %s14, 1
    %p194 = scmp.ne.s32.totalorder %s189, %s191
    %p195 = scmp.eq.s32.totalorder %s14, 0
    %p196 = por %p194, %p195
    %p197 = scmp.ne.s32.totalorder %s189, %s191
    %p198 = scmp.eq.s32.totalorder %s19, 1
    %p199 = por %p197, %p198
    %p200 = scmp.ne.s32.totalorder %s191, %s192
    %p201 = scmp.eq.s32.totalorder %s19, 0
    %p202 = por %p200, %p201
    %p203 = scmp.ne.s32.totalorder %s191, %s192
    %p204 = scmp.eq.s32.totalorder %s20, 1
    %p205 = por %p203, %p204
    %p207 = scmp.ne.s32.totalorder %s192, %s206
    %p208 = scmp.eq.s32.totalorder %s20, 0
    %p209 = por %p207, %p208
    %s210 = ssub.s32 %s14, %s21
    %p211 = scmp.eq.s32.totalorder %s210, 0
    %s213 = sadd.s32 %s212, 1
    %s214 = scalar_select %p211, %s212, %s213
    %p217 = pneg %p211
    %p218 = scmp.eq.s32.totalorder %s14, 1
    %p219 = por %p217, %p218
    %p220 = scmp.ne.s32.totalorder %s212, %s215
    %p221 = scmp.eq.s32.totalorder %s14, 0
    %p222 = por %p220, %p221
    %p223 = scmp.ne.s32.totalorder %s212, %s215
    %p224 = scmp.eq.s32.totalorder %s19, 1
    %p225 = por %p223, %p224
    %p226 = scmp.ne.s32.totalorder %s215, %s216
    %p227 = scmp.eq.s32.totalorder %s19, 0
    %p228 = por %p226, %p227
    %p229 = scmp.ne.s32.totalorder %s215, %s216
    %p230 = scmp.eq.s32.totalorder %s20, 1
    %p231 = por %p229, %p230
    %p233 = scmp.ne.s32.totalorder %s216, %s232
    %p234 = scmp.eq.s32.totalorder %s20, 0
    %p235 = por %p233, %p234
    %p236 = scmp.le.s32.totalorder 1, %s14
    %p237 = scmp.lt.s32.totalorder %s14, 3
    %p238 = pnand %p236, %p237
    %p239 = pneg %p238
    // Predicated region
    $region9: #{tpu_custom_call.1} parent=5 // pred_check
      _
    $region10: #{tpu_custom_call.1} parent=5 // pred_check_branch
      %241 = sbr.rel (%p238) target = $region12
    $region11: #{tpu_custom_call.1} parent=5 // pred_region
      %s242 = ssub.s32 %s14, 1
      // Predicated region
      $region13: #{tpu_custom_call.1} parent=11 // pred_check
        %p243 = pneg %p139
      $region14: #{tpu_custom_call.1} parent=11 // pred_check_branch
        %245 = sbr.rel (%p243) target = $region16
      $region15: #{tpu_custom_call.1} parent=11 // pred_region
        _
      $region16: #{tpu_custom_call.1} parent=11 // pred_fallthru
        _
      // Predicated region
      $region17: #{tpu_custom_call.1} parent=11 // pred_check
        %p246 = pneg %p160
      $region18: #{tpu_custom_call.1} parent=11 // pred_check_branch
        %248 = sbr.rel (%p246) target = $region20
      $region19: #{tpu_custom_call.1} parent=11 // pred_region
        _
      $region20: #{tpu_custom_call.1} parent=11 // pred_fallthru
        _
      // Predicated region
      $region21: #{tpu_custom_call.1} parent=11 // pred_check
        %p249 = pneg %p181
      $region22: #{tpu_custom_call.1} parent=11 // pred_check_branch
        %251 = sbr.rel (%p249) target = $region24
      $region23: #{tpu_custom_call.1} parent=11 // pred_region
        _
      $region24: #{tpu_custom_call.1} parent=11 // pred_fallthru
        _
      // Predicated region
      $region25: #{tpu_custom_call.1} parent=11 // pred_check
        %p252 = pneg %p202
      $region26: #{tpu_custom_call.1} parent=11 // pred_check_branch
        %254 = sbr.rel (%p252) target = $region28
      $region27: #{tpu_custom_call.1} parent=11 // pred_region
        _
      $region28: #{tpu_custom_call.1} parent=11 // pred_fallthru
        _
    $region12: #{tpu_custom_call.1} parent=5 // pred_fallthru
      _
    %p255 = scmp.lt.s32.totalorder %s14, 2
    // Predicated region
    $region29: #{tpu_custom_call.1} parent=5 // pred_check
      %p256 = pneg %p255
    $region30: #{tpu_custom_call.1} parent=5 // pred_check_branch
      %258 = sbr.rel (%p256) target = $region32
    $region31: #{tpu_custom_call.1} parent=5 // pred_region
      // Predicated region
      $region33: #{tpu_custom_call.1} parent=31 // pred_check
        %p259 = pneg %p34
      $region34: #{tpu_custom_call.1} parent=31 // pred_check_branch
        %261 = sbr.rel (%p259) target = $region36
      $region35: #{tpu_custom_call.1} parent=31 // pred_region
        %s262 = smul.u32 4, %s14
        %p263 = scmp.lt.s32.totalorder %s262, 7
        %s264 = scalar_select %p263, %s262, 7
        %s265 = smul.addr %s264, 8
        %s266 = scalar_lea.vmem %s0, %s265
        %s267 = smul.u32 4, %s14
      $region36: #{tpu_custom_call.1} parent=31 // pred_fallthru
        _
      // Predicated region
      $region37: #{tpu_custom_call.1} parent=31 // pred_check
        %p268 = pneg %p60
      $region38: #{tpu_custom_call.1} parent=31 // pred_check_branch
        %270 = sbr.rel (%p268) target = $region40
      $region39: #{tpu_custom_call.1} parent=31 // pred_region
        %s271 = smul.u32 4, %s14
        %p272 = scmp.lt.s32.totalorder %s271, 7
        %s273 = scalar_select %p272, %s271, 7
        %s274 = smul.addr %s273, 8
        %s275 = scalar_lea.vmem %s1, %s274
        %s276 = smul.u32 4, %s14
      $region40: #{tpu_custom_call.1} parent=31 // pred_fallthru
        _
      // Predicated region
      $region41: #{tpu_custom_call.1} parent=31 // pred_check
        %p277 = pneg %p86
      $region42: #{tpu_custom_call.1} parent=31 // pred_check_branch
        %279 = sbr.rel (%p277) target = $region44
      $region43: #{tpu_custom_call.1} parent=31 // pred_region
        %s280 = smul.u32 4, %s14
        %p281 = scmp.lt.s32.totalorder %s280, 7
        %s282 = scalar_select %p281, %s280, 7
        %s283 = smul.addr %s282, 8
        %s284 = scalar_lea.vmem %s2, %s283
        %s285 = smul.u32 4, %s14
      $region44: #{tpu_custom_call.1} parent=31 // pred_fallthru
        _
      // Predicated region
      $region45: #{tpu_custom_call.1} parent=31 // pred_check
        %p286 = pneg %p112
      $region46: #{tpu_custom_call.1} parent=31 // pred_check_branch
        %288 = sbr.rel (%p286) target = $region48
      $region47: #{tpu_custom_call.1} parent=31 // pred_region
        %s289 = smul.u32 4, %s14
        %p290 = scmp.lt.s32.totalorder %s289, 7
        %s291 = scalar_select %p290, %s289, 7
        %s292 = smul.addr %s291, 8
        %s293 = scalar_lea.vmem %s3, %s292
        %s294 = smul.u32 4, %s14
      $region48: #{tpu_custom_call.1} parent=31 // pred_fallthru
        _
    $region32: #{tpu_custom_call.1} parent=5 // pred_fallthru
      _
    %p295 = scmp.le.s32.totalorder 1, %s14
    %p296 = scmp.lt.s32.totalorder %s14, 3
    %p297 = pnand %p295, %p296
    %p298 = pneg %p297
    // Predicated region
    $region49: #{tpu_custom_call.1} parent=5 // pred_check
      _
    $region50: #{tpu_custom_call.1} parent=5 // pred_check_branch
      %300 = sbr.rel (%p297) target = $region52
    $region51: #{tpu_custom_call.1} parent=5 // pred_region
      %s301 = ssub.s32 %s14, 1
      %s302 = smul.u32 4, %s19
      %p303 = scmp.lt.s32.totalorder %s302, 7
      %s304 = scalar_select %p303, %s302, 7
      %s305 = smul.addr %s304, 8
      %s306 = scalar_lea.vmem %s0, %s305
      %p307 = pneg %p40
      %p308 = pneg %p37
      %s309 = smul.u32 4, %s19
      %p310 = scmp.lt.s32.totalorder %s309, 7
      %s311 = scalar_select %p310, %s309, 7
      %s312 = smul.addr %s311, 8
      %s313 = scalar_lea.vmem %s1, %s312
      %p314 = pneg %p66
      %p315 = pneg %p63
      %s316 = smul.u32 4, %s19
      %p317 = scmp.lt.s32.totalorder %s316, 7
      %s318 = scalar_select %p317, %s316, 7
      %s319 = smul.addr %s318, 8
      %s320 = scalar_lea.vmem %s2, %s319
      %p321 = pneg %p92
      %p322 = pneg %p89
      %s323 = smul.u32 4, %s19
      %p324 = scmp.lt.s32.totalorder %s323, 7
      %s325 = scalar_select %p324, %s323, 7
      %s326 = smul.addr %s325, 8
      %s327 = scalar_lea.vmem %s3, %s326
      %p328 = pneg %p118
      %p329 = pneg %p115
      %p330 = pneg %p139
      %p331 = pneg %p136
      %p332 = pneg %p160
      %p333 = pneg %p157
      %p334 = pneg %p181
      %p335 = pneg %p178
      %p336 = pneg %p202
      %p337 = pneg %p199
      %p338 = pneg %p228
      %p339 = pneg %p225
      %s340 = smul.u32 4, %s19
      %p341 = scmp.lt.s32.totalorder %s340, 7
      %s342 = scalar_select %p341, %s340, 7
      %s343 = smul.addr %s342, 8
      %s344 = scalar_lea.vmem %s8, %s343
      %s345 = smul.u32 4, %s19
      %p346 = scmp.lt.s32.totalorder %s345, 7
      %s347 = scalar_select %p346, %s345, 7
      %s348 = smul.addr %s347, 8
      %s349 = scalar_lea.vmem %s0, %s348
      %s350 = smul.u32 4, %s19
      %s351 = smul.u32 4, %s19
      %p352 = scmp.lt.s32.totalorder %s351, 7
      %s353 = scalar_select %p352, %s351, 7
      %s354 = smul.addr %s353, 8
      %s355 = scalar_lea.vmem %s1, %s354
      %s356 = smul.u32 4, %s19
      %s357 = smul.u32 4, %s19
      %p358 = scmp.lt.s32.totalorder %s357, 7
      %s359 = scalar_select %p358, %s357, 7
      %s360 = smul.addr %s359, 8
      %s361 = scalar_lea.vmem %s2, %s360
      %s362 = smul.u32 4, %s19
      %s363 = smul.u32 4, %s19
      %p364 = scmp.lt.s32.totalorder %s363, 7
      %s365 = scalar_select %p364, %s363, 7
      %s366 = smul.addr %s365, 8
      %s367 = scalar_lea.vmem %s3, %s366
      %s368 = smul.u32 4, %s19
      %s369 = smul.u32 4, %s19
      %p370 = scmp.lt.s32.totalorder %s369, 7
      %s371 = scalar_select %p370, %s369, 7
      %s372 = smul.addr %s371, 8
      %s373 = scalar_lea.vmem %s8, %s372
      %s374 = smul.u32 4, %s19
      %v375 = vld [vmem:[%s349] sm:$0xff]
      %v376 = vld [vmem:[%s349 + $0x8] sm:$0xff]
      %v377 = vld [vmem:[%s349 + $0x10] sm:$0xff]
      %v378 = vld [vmem:[%s349 + $0x18] sm:$0xff]
      %v379 = vld [vmem:[%s4] sm:$0xff]
      %v380 = vld [vmem:[%s355] sm:$0xff]
      %v381 = vld [vmem:[%s355 + $0x8] sm:$0xff]
      %v382 = vld [vmem:[%s355 + $0x10] sm:$0xff]
      %v383 = vld [vmem:[%s355 + $0x18] sm:$0xff]
      %v384 = vld [vmem:[%s5] sm:$0xff]
      %vm385 = vcmask 64512
      %v387 = vsel %vm385, %v380, 0
      %v390 = vsel %vm385, %v381, 0
      %v393 = vsel %vm385, %v382, 0
      %v396 = vsel %vm385, %v383, 0
      %398 = vmatprep.subr.mxu0 0.0
      %399 = vmatpush1.msra.mxu0 0.0
      %400 = vmatprep.subr.mxu0 0.0
      %401 = vmatpush1.msra.mxu0 0.0
      %402 = vmatprep.subr.mxu0 0.0
      %403 = vmatpush1.msra.mxu0 0.0
      %404 = vmatprep.subr.mxu0 0.0
      %405 = vmatpush1.msra.mxu0 0.0
      %406 = vmatprep.subr.mxu0 0.0
      %407 = vmatpush1.msra.mxu0 0.0
      %408 = vmatprep.subr.mxu0 0.0
      %409 = vmatpush1.msra.mxu0 0.0
      %410 = vmatprep.subr.mxu0 0.0
      %411 = vmatpush1.msra.mxu0 0.0
      %412 = vmatprep.subr.mxu0 0.0
      %413 = vmatpush1.msra.mxu0 0.0
      %414 = vmatprep.subr.mxu0 0.0
      %415 = vmatpush1.msra.mxu0 0.0
      %416 = vmatprep.subr.mxu0 0.0
      %417 = vmatpush1.msra.mxu0 0.0
      %418 = vmatprep.subr.mxu0 0.0
      %419 = vmatpush1.msra.mxu0 0.0
      %420 = vmatprep.subr.mxu0 0.0
      %421 = vmatpush1.msra.mxu0 0.0
      %422 = vmatprep.subr.mxu0 0.0
      %423 = vmatpush1.msra.mxu0 0.0
      %424 = vmatprep.subr.mxu0 0.0
      %425 = vmatpush1.msra.mxu0 0.0
      %426 = vmatprep.subr.mxu0 0.0
      %427 = vmatpush1.msra.mxu0 0.0
      %428 = vmatprep.subr.mxu0 0.0
      %429 = vmatpush1.msra.mxu0 %v384
      %430 = vmatprep.subr.mxu0 0.0
      %431 = vmatpush2.msra.mxu0 0.0
      %432 = vmatprep.subr.mxu0 0.0
      %433 = vmatpush2.msra.mxu0 0.0
      %434 = vmatprep.subr.mxu0 0.0
      %435 = vmatpush2.msra.mxu0 0.0
      %436 = vmatprep.subr.mxu0 0.0
      %437 = vmatpush2.msra.mxu0 0.0
      %438 = vmatprep.subr.mxu0 0.0
      %439 = vmatpush2.msra.mxu0 0.0
      %440 = vmatprep.subr.mxu0 0.0
      %441 = vmatpush2.msra.mxu0 0.0
      %442 = vmatprep.subr.mxu0 0.0
      %443 = vmatpush2.msra.mxu0 0.0
      %444 = vmatprep.subr.mxu0 0.0
      %445 = vmatpush2.msra.mxu0 0.0
      %446 = vmatprep.subr.mxu0 0.0
      %447 = vmatpush2.msra.mxu0 0.0
      %448 = vmatprep.subr.mxu0 0.0
      %449 = vmatpush2.msra.mxu0 0.0
      %450 = vmatprep.subr.mxu0 0.0
      %451 = vmatpush2.msra.mxu0 0.0
      %452 = vmatprep.subr.mxu0 0.0
      %453 = vmatpush2.msra.mxu0 0.0
      %454 = vmatprep.subr.mxu0 0.0
      %455 = vmatpush2.msra.mxu0 0.0
      %456 = vmatprep.subr.mxu0 0.0
      %457 = vmatpush2.msra.mxu0 0.0
      %458 = vmatprep.subr.mxu0 0.0
      %459 = vmatpush2.msra.mxu0 0.0
      %460 = vmatprep.subr.mxu0 0.0
      %461 = vmatpush2.msra.mxu0 0.0
      %462 = vmatprep.mubr.f32.mxu0 0.0
      %463 = vmatmul.mubr.f32.gmra.mxu0 %v387
      %v464 = vpop.f32.mrf.mxu0
      %v465 = vadd.f32 0.0, %v464
      %v466 = vpop.f32.mrf.mxu0
      %467 = vmatprep.mubr.f32.mxu0 0.0
      %468 = vmatmul.mubr.f32.gmra.mxu0 %v390
      %v469 = vpop.f32.mrf.mxu0
      %v470 = vadd.f32 0.0, %v469
      %v471 = vpop.f32.mrf.mxu0
      %472 = vmatprep.mubr.f32.mxu0 0.0
      %473 = vmatmul.mubr.f32.gmra.mxu0 %v393
      %v474 = vpop.f32.mrf.mxu0
      %v475 = vadd.f32 0.0, %v474
      %v476 = vpop.f32.mrf.mxu0
      %477 = vmatprep.mubr.f32.mxu0 0.0
      %478 = vmatmul.mubr.f32.gmra.mxu0 %v396
      %v479 = vpop.f32.mrf.mxu0
      %v480 = vadd.f32 0.0, %v479
      %v481 = vpop.f32.mrf.mxu0
      %482 = vdwg.mxu0
      %v484 = vsel %vm385, %v375, 0
      %v487 = vsel %vm385, %v376, 0
      %v490 = vsel %vm385, %v377, 0
      %v493 = vsel %vm385, %v378, 0
      %495 = vmatprep.subr.mxu0 0.0
      %496 = vmatpush1.msra.mxu0 0.0
      %497 = vmatprep.subr.mxu0 0.0
      %498 = vmatpush1.msra.mxu0 0.0
      %499 = vmatprep.subr.mxu0 0.0
      %500 = vmatpush1.msra.mxu0 0.0
      %501 = vmatprep.subr.mxu0 0.0
      %502 = vmatpush1.msra.mxu0 0.0
      %503 = vmatprep.subr.mxu0 0.0
      %504 = vmatpush1.msra.mxu0 0.0
      %505 = vmatprep.subr.mxu0 0.0
      %506 = vmatpush1.msra.mxu0 0.0
      %507 = vmatprep.subr.mxu0 0.0
      %508 = vmatpush1.msra.mxu0 0.0
      %509 = vmatprep.subr.mxu0 0.0
      %510 = vmatpush1.msra.mxu0 0.0
      %511 = vmatprep.subr.mxu0 0.0
      %512 = vmatpush1.msra.mxu0 0.0
      %513 = vmatprep.subr.mxu0 0.0
      %514 = vmatpush1.msra.mxu0 0.0
      %515 = vmatprep.subr.mxu0 0.0
      %516 = vmatpush1.msra.mxu0 0.0
      %517 = vmatprep.subr.mxu0 0.0
      %518 = vmatpush1.msra.mxu0 0.0
      %519 = vmatprep.subr.mxu0 0.0
      %520 = vmatpush1.msra.mxu0 0.0
      %521 = vmatprep.subr.mxu0 0.0
      %522 = vmatpush1.msra.mxu0 0.0
      %523 = vmatprep.subr.mxu0 0.0
      %524 = vmatpush1.msra.mxu0 0.0
      %525 = vmatprep.subr.mxu0 0.0
      %526 = vmatpush1.msra.mxu0 %v379
      %527 = vmatprep.subr.mxu0 0.0
      %528 = vmatpush2.msra.mxu0 0.0
      %529 = vmatprep.subr.mxu0 0.0
      %530 = vmatpush2.msra.mxu0 0.0
      %531 = vmatprep.subr.mxu0 0.0
      %532 = vmatpush2.msra.mxu0 0.0
      %533 = vmatprep.subr.mxu0 0.0
      %534 = vmatpush2.msra.mxu0 0.0
      %535 = vmatprep.subr.mxu0 0.0
      %536 = vmatpush2.msra.mxu0 0.0
      %537 = vmatprep.subr.mxu0 0.0
      %538 = vmatpush2.msra.mxu0 0.0
      %539 = vmatprep.subr.mxu0 0.0
      %540 = vmatpush2.msra.mxu0 0.0
      %541 = vmatprep.subr.mxu0 0.0
      %542 = vmatpush2.msra.mxu0 0.0
      %543 = vmatprep.subr.mxu0 0.0
      %544 = vmatpush2.msra.mxu0 0.0
      %545 = vmatprep.subr.mxu0 0.0
      %546 = vmatpush2.msra.mxu0 0.0
      %547 = vmatprep.subr.mxu0 0.0
      %548 = vmatpush2.msra.mxu0 0.0
      %549 = vmatprep.subr.mxu0 0.0
      %550 = vmatpush2.msra.mxu0 0.0
      %551 = vmatprep.subr.mxu0 0.0
      %552 = vmatpush2.msra.mxu0 0.0
      %553 = vmatprep.subr.mxu0 0.0
      %554 = vmatpush2.msra.mxu0 0.0
      %555 = vmatprep.subr.mxu0 0.0
      %556 = vmatpush2.msra.mxu0 0.0
      %557 = vmatprep.subr.mxu0 0.0
      %558 = vmatpush2.msra.mxu0 0.0
      %559 = vmatprep.mubr.f32.mxu0 0.0
      %560 = vmatmul.mubr.f32.gmra.mxu0 %v484
      %v561 = vpop.f32.mrf.mxu0
      %v562 = vadd.f32 %v465, %v561
      %v563 = vpop.f32.mrf.mxu0
      %564 = vmatprep.mubr.f32.mxu0 0.0
      %565 = vmatmul.mubr.f32.gmra.mxu0 %v487
      %v566 = vpop.f32.mrf.mxu0
      %v567 = vadd.f32 %v470, %v566
      %v568 = vpop.f32.mrf.mxu0
      %569 = vmatprep.mubr.f32.mxu0 0.0
      %570 = vmatmul.mubr.f32.gmra.mxu0 %v490
      %v571 = vpop.f32.mrf.mxu0
      %v572 = vadd.f32 %v475, %v571
      %v573 = vpop.f32.mrf.mxu0
      %574 = vmatprep.mubr.f32.mxu0 0.0
      %575 = vmatmul.mubr.f32.gmra.mxu0 %v493
      %v576 = vpop.f32.mrf.mxu0
      %v577 = vadd.f32 %v480, %v576
      %v578 = vpop.f32.mrf.mxu0
      %579 = vdwg.mxu0
      %v580 = vld [vmem:[%s361] sm:$0xff]
      %v581 = vld [vmem:[%s361 + $0x8] sm:$0xff]
      %v582 = vld [vmem:[%s361 + $0x10] sm:$0xff]
      %v583 = vld [vmem:[%s361 + $0x18] sm:$0xff]
      %v584 = vld [vmem:[%s6] sm:$0xff]
      %v586 = vsel %vm385, %v580, 0
      %v589 = vsel %vm385, %v581, 0
      %v592 = vsel %vm385, %v582, 0
      %v595 = vsel %vm385, %v583, 0
      %597 = vmatprep.subr.mxu0 0.0
      %598 = vmatpush1.msra.mxu0 0.0
      %599 = vmatprep.subr.mxu0 0.0
      %600 = vmatpush1.msra.mxu0 0.0
      %601 = vmatprep.subr.mxu0 0.0
      %602 = vmatpush1.msra.mxu0 0.0
      %603 = vmatprep.subr.mxu0 0.0
      %604 = vmatpush1.msra.mxu0 0.0
      %605 = vmatprep.subr.mxu0 0.0
      %606 = vmatpush1.msra.mxu0 0.0
      %607 = vmatprep.subr.mxu0 0.0
      %608 = vmatpush1.msra.mxu0 0.0
      %609 = vmatprep.subr.mxu0 0.0
      %610 = vmatpush1.msra.mxu0 0.0
      %611 = vmatprep.subr.mxu0 0.0
      %612 = vmatpush1.msra.mxu0 0.0
      %613 = vmatprep.subr.mxu0 0.0
      %614 = vmatpush1.msra.mxu0 0.0
      %615 = vmatprep.subr.mxu0 0.0
      %616 = vmatpush1.msra.mxu0 0.0
      %617 = vmatprep.subr.mxu0 0.0
      %618 = vmatpush1.msra.mxu0 0.0
      %619 = vmatprep.subr.mxu0 0.0
      %620 = vmatpush1.msra.mxu0 0.0
      %621 = vmatprep.subr.mxu0 0.0
      %622 = vmatpush1.msra.mxu0 0.0
      %623 = vmatprep.subr.mxu0 0.0
      %624 = vmatpush1.msra.mxu0 0.0
      %625 = vmatprep.subr.mxu0 0.0
      %626 = vmatpush1.msra.mxu0 0.0
      %627 = vmatprep.subr.mxu0 0.0
      %628 = vmatpush1.msra.mxu0 %v584
      %629 = vmatprep.subr.mxu0 0.0
      %630 = vmatpush2.msra.mxu0 0.0
      %631 = vmatprep.subr.mxu0 0.0
      %632 = vmatpush2.msra.mxu0 0.0
      %633 = vmatprep.subr.mxu0 0.0
      %634 = vmatpush2.msra.mxu0 0.0
      %635 = vmatprep.subr.mxu0 0.0
      %636 = vmatpush2.msra.mxu0 0.0
      %637 = vmatprep.subr.mxu0 0.0
      %638 = vmatpush2.msra.mxu0 0.0
      %639 = vmatprep.subr.mxu0 0.0
      %640 = vmatpush2.msra.mxu0 0.0
      %641 = vmatprep.subr.mxu0 0.0
      %642 = vmatpush2.msra.mxu0 0.0
      %643 = vmatprep.subr.mxu0 0.0
      %644 = vmatpush2.msra.mxu0 0.0
      %645 = vmatprep.subr.mxu0 0.0
      %646 = vmatpush2.msra.mxu0 0.0
      %647 = vmatprep.subr.mxu0 0.0
      %648 = vmatpush2.msra.mxu0 0.0
      %649 = vmatprep.subr.mxu0 0.0
      %650 = vmatpush2.msra.mxu0 0.0
      %651 = vmatprep.subr.mxu0 0.0
      %652 = vmatpush2.msra.mxu0 0.0
      %653 = vmatprep.subr.mxu0 0.0
      %654 = vmatpush2.msra.mxu0 0.0
      %655 = vmatprep.subr.mxu0 0.0
      %656 = vmatpush2.msra.mxu0 0.0
      %657 = vmatprep.subr.mxu0 0.0
      %658 = vmatpush2.msra.mxu0 0.0
      %659 = vmatprep.subr.mxu0 0.0
      %660 = vmatpush2.msra.mxu0 0.0
      %661 = vmatprep.mubr.f32.mxu0 0.0
      %662 = vmatmul.mubr.f32.gmra.mxu0 %v586
      %v663 = vpop.f32.mrf.mxu0
      %v664 = vadd.f32 0.0, %v663
      %v665 = vpop.f32.mrf.mxu0
      %666 = vmatprep.mubr.f32.mxu0 0.0
      %667 = vmatmul.mubr.f32.gmra.mxu0 %v589
      %v668 = vpop.f32.mrf.mxu0
      %v669 = vadd.f32 0.0, %v668
      %v670 = vpop.f32.mrf.mxu0
      %671 = vmatprep.mubr.f32.mxu0 0.0
      %672 = vmatmul.mubr.f32.gmra.mxu0 %v592
      %v673 = vpop.f32.mrf.mxu0
      %v674 = vadd.f32 0.0, %v673
      %v675 = vpop.f32.mrf.mxu0
      %676 = vmatprep.mubr.f32.mxu0 0.0
      %677 = vmatmul.mubr.f32.gmra.mxu0 %v595
      %v678 = vpop.f32.mrf.mxu0
      %v679 = vadd.f32 0.0, %v678
      %v680 = vpop.f32.mrf.mxu0
      %681 = vdwg.mxu0
      %v682 = vadd.f32 %v562, %v664
      %v683 = vadd.f32 %v567, %v669
      %v684 = vadd.f32 %v572, %v674
      %v685 = vadd.f32 %v577, %v679
      %v686 = vld [vmem:[%s367] sm:$0xff]
      %v687 = vld [vmem:[%s367 + $0x8] sm:$0xff]
      %v688 = vld [vmem:[%s367 + $0x10] sm:$0xff]
      %v689 = vld [vmem:[%s367 + $0x18] sm:$0xff]
      %v690 = vld [vmem:[%s7] sm:$0xff]
      %v692 = vsel %vm385, %v686, 0
      %v695 = vsel %vm385, %v687, 0
      %v698 = vsel %vm385, %v688, 0
      %v701 = vsel %vm385, %v689, 0
      %703 = vmatprep.subr.mxu0 0.0
      %704 = vmatpush1.msra.mxu0 0.0
      %705 = vmatprep.subr.mxu0 0.0
      %706 = vmatpush1.msra.mxu0 0.0
      %707 = vmatprep.subr.mxu0 0.0
      %708 = vmatpush1.msra.mxu0 0.0
      %709 = vmatprep.subr.mxu0 0.0
      %710 = vmatpush1.msra.mxu0 0.0
      %711 = vmatprep.subr.mxu0 0.0
      %712 = vmatpush1.msra.mxu0 0.0
      %713 = vmatprep.subr.mxu0 0.0
      %714 = vmatpush1.msra.mxu0 0.0
      %715 = vmatprep.subr.mxu0 0.0
      %716 = vmatpush1.msra.mxu0 0.0
      %717 = vmatprep.subr.mxu0 0.0
      %718 = vmatpush1.msra.mxu0 0.0
      %719 = vmatprep.subr.mxu0 0.0
      %720 = vmatpush1.msra.mxu0 0.0
      %721 = vmatprep.subr.mxu0 0.0
      %722 = vmatpush1.msra.mxu0 0.0
      %723 = vmatprep.subr.mxu0 0.0
      %724 = vmatpush1.msra.mxu0 0.0
      %725 = vmatprep.subr.mxu0 0.0
      %726 = vmatpush1.msra.mxu0 0.0
      %727 = vmatprep.subr.mxu0 0.0
      %728 = vmatpush1.msra.mxu0 0.0
      %729 = vmatprep.subr.mxu0 0.0
      %730 = vmatpush1.msra.mxu0 0.0
      %731 = vmatprep.subr.mxu0 0.0
      %732 = vmatpush1.msra.mxu0 0.0
      %733 = vmatprep.subr.mxu0 0.0
      %734 = vmatpush1.msra.mxu0 %v690
      %735 = vmatprep.subr.mxu0 0.0
      %736 = vmatpush2.msra.mxu0 0.0
      %737 = vmatprep.subr.mxu0 0.0
      %738 = vmatpush2.msra.mxu0 0.0
      %739 = vmatprep.subr.mxu0 0.0
      %740 = vmatpush2.msra.mxu0 0.0
      %741 = vmatprep.subr.mxu0 0.0
      %742 = vmatpush2.msra.mxu0 0.0
      %743 = vmatprep.subr.mxu0 0.0
      %744 = vmatpush2.msra.mxu0 0.0
      %745 = vmatprep.subr.mxu0 0.0
      %746 = vmatpush2.msra.mxu0 0.0
      %747 = vmatprep.subr.mxu0 0.0
      %748 = vmatpush2.msra.mxu0 0.0
      %749 = vmatprep.subr.mxu0 0.0
      %750 = vmatpush2.msra.mxu0 0.0
      %751 = vmatprep.subr.mxu0 0.0
      %752 = vmatpush2.msra.mxu0 0.0
      %753 = vmatprep.subr.mxu0 0.0
      %754 = vmatpush2.msra.mxu0 0.0
      %755 = vmatprep.subr.mxu0 0.0
      %756 = vmatpush2.msra.mxu0 0.0
      %757 = vmatprep.subr.mxu0 0.0
      %758 = vmatpush2.msra.mxu0 0.0
      %759 = vmatprep.subr.mxu0 0.0
      %760 = vmatpush2.msra.mxu0 0.0
      %761 = vmatprep.subr.mxu0 0.0
      %762 = vmatpush2.msra.mxu0 0.0
      %763 = vmatprep.subr.mxu0 0.0
      %764 = vmatpush2.msra.mxu0 0.0
      %765 = vmatprep.subr.mxu0 0.0
      %766 = vmatpush2.msra.mxu0 0.0
      %767 = vmatprep.mubr.f32.mxu0 0.0
      %768 = vmatmul.mubr.f32.gmra.mxu0 %v692
      %v769 = vpop.f32.mrf.mxu0
      %v770 = vadd.f32 0.0, %v769
      %v771 = vpop.f32.mrf.mxu0
      %772 = vmatprep.mubr.f32.mxu0 0.0
      %773 = vmatmul.mubr.f32.gmra.mxu0 %v695
      %v774 = vpop.f32.mrf.mxu0
      %v775 = vadd.f32 0.0, %v774
      %v776 = vpop.f32.mrf.mxu0
      %777 = vmatprep.mubr.f32.mxu0 0.0
      %778 = vmatmul.mubr.f32.gmra.mxu0 %v698
      %v779 = vpop.f32.mrf.mxu0
      %v780 = vadd.f32 0.0, %v779
      %v781 = vpop.f32.mrf.mxu0
      %782 = vmatprep.mubr.f32.mxu0 0.0
      %783 = vmatmul.mubr.f32.gmra.mxu0 %v701
      %v784 = vpop.f32.mrf.mxu0
      %v785 = vadd.f32 0.0, %v784
      %v786 = vpop.f32.mrf.mxu0
      %787 = vdwg.mxu0
      %v788 = vadd.f32 %v682, %v770
      %v789 = vadd.f32 %v683, %v775
      %v790 = vadd.f32 %v684, %v780
      %v791 = vadd.f32 %v685, %v785
      %vm792 = vcmask 261120
      %793 = vst.msk [vmem:[%s373] sm:$0xff] %vm792, %v788
      %794 = vst.msk [vmem:[%s373 + $0x8] sm:$0xff] %vm792, %v789
      %795 = vst.msk [vmem:[%s373 + $0x10] sm:$0xff] %vm792, %v790
      %796 = vst.msk [vmem:[%s373 + $0x18] sm:$0xff] %vm792, %v791
      %s797 = smul.u32 4, %s19
      %p798 = scmp.lt.s32.totalorder %s797, 7
      %s799 = scalar_select %p798, %s797, 7
      %s800 = smul.addr %s799, 8
      %s801 = scalar_lea.vmem %s8, %s800
      // Predicated region
      $region53: #{tpu_custom_call.1} parent=51 // pred_check
        %p802 = pneg %p225
      $region54: #{tpu_custom_call.1} parent=51 // pred_check_branch
        %804 = sbr.rel (%p802) target = $region56
      $region55: #{tpu_custom_call.1} parent=51 // pred_region
        %s805 = smul.u32 4, %s19
      $region56: #{tpu_custom_call.1} parent=51 // pred_fallthru
        _
    $region52: #{tpu_custom_call.1} parent=5 // pred_fallthru
      _
    %p806 = scmp.le.s32.totalorder 2, %s14
    // Predicated region
    $region57: #{tpu_custom_call.1} parent=5 // pred_check
      %p807 = pneg %p806
    $region58: #{tpu_custom_call.1} parent=5 // pred_check_branch
      %809 = sbr.rel (%p807) target = $region60
    $region59: #{tpu_custom_call.1} parent=5 // pred_region
      %s810 = ssub.s32 %s14, 2
      // Predicated region
      $region61: #{tpu_custom_call.1} parent=59 // pred_check
        %p811 = pneg %p231
      $region62: #{tpu_custom_call.1} parent=59 // pred_check_branch
        %813 = sbr.rel (%p811) target = $region64
      $region63: #{tpu_custom_call.1} parent=59 // pred_region
        %s814 = smul.u32 4, %s20
        %p815 = scmp.lt.s32.totalorder %s814, 7
        %s816 = scalar_select %p815, %s814, 7
        %s817 = smul.addr %s816, 8
        %s818 = scalar_lea.vmem %s8, %s817
      $region64: #{tpu_custom_call.1} parent=59 // pred_fallthru
        _
    $region60: #{tpu_custom_call.1} parent=5 // pred_fallthru
      _
  $region6: #{tpu_custom_call.1} parent=0 // loop_footer
    %s18 = sadd.s32 1, %s14
  $region7: #{tpu_custom_call.1} parent=0 // loop_footer_branch
    %13 = sbr.rel target = $region3
  $region8: #{tpu_custom_call.1} parent=0 // loop_exit
    _

</llo_original>
